<compile_context>
chip_gen: v5e
topology: v5e:2x2
jax: 0.10.0
libtpu: 0.0.40
codegen_flags: <defaults>
</compile_context>

<pallas_src>
import functools
import math

import jax
import jax.numpy as jnp
from jax.experimental import pallas as pl
from jax.experimental.pallas import tpu as pltpu

MASK_FILL = -1e10  # torch masked_fill value (-10000000000.0)


# --------------------------------- kernel ---------------------------------- #

def _sdpa_kernel(*refs, scale, has_mask, mask_rows_one, dropout_rate):
    idx = 0
    q_ref = refs[idx]; idx += 1
    k_ref = refs[idx]; idx += 1
    v_ref = refs[idx]; idx += 1
    mask_ref = None
    if has_mask:
        mask_ref = refs[idx]; idx += 1
    seed_ref = None
    if dropout_rate > 0.0:
        seed_ref = refs[idx]; idx += 1
    out_ref, attn_ref = refs[idx], refs[idx + 1]

    q = q_ref[0]                                   # (TQ, D)  native dtype
    k = k_ref[0]                                   # (Lk, D)  native dtype
    v = v_ref[0]                                   # (Lk, Dv) native dtype

    # Fold the static scale into q (TQ*D mults, not TQ*Lk on the score tile).
    qs = q * jnp.asarray(scale, q.dtype)

    # scores = (q*scale) @ k^T — native-dtype MXU operands, f32 accumulate,
    # contraction on D for both operands (no transpose copy).
    s = jax.lax.dot_general(
        qs, k, dimension_numbers=(((1,), (1,)), ((), ())),
        preferred_element_type=jnp.float32)        # (TQ, Lk) f32

    if has_mask:
        m = mask_ref[0].astype(jnp.float32)        # (MQ, Lk), MQ in {1, TQ}
        if mask_rows_one:
            m = jnp.broadcast_to(m, s.shape)       # expand compact key-padding mask
        s = jnp.where(m != 0.0, MASK_FILL, s)      # masked_fill(mask, -1e10)

    # numerically-stable softmax over keys (torch Softmax(dim=2)), f32 math;
    # divide replaced by EUP reciprocal-multiply.
    s_max = jnp.max(s, axis=-1, keepdims=True)
    e = jnp.exp(s - s_max)
    denom = jnp.sum(e, axis=-1, keepdims=True)
    p = e * pl.reciprocal(denom, approx=True)      # (TQ, Lk) f32

    if dropout_rate > 0.0:
        # Training-mode dropout via the on-chip PRNG (inverted-dropout scaling).
        step = pl.program_id(0) * pl.num_programs(1) + pl.program_id(1)
        pltpu.prng_seed(seed_ref[0] + step)
        bits = pltpu.bitcast(pltpu.prng_random_bits(p.shape), jnp.uint32)
        keep_thresh = jnp.uint32(
            min(int((1.0 - dropout_rate) * 4294967296.0), 4294967295))
        p = jnp.where(bits < keep_thresh, p * (1.0 / (1.0 - dropout_rate)), 0.0)

    attn_ref[0] = p.astype(attn_ref.dtype)
    # P@V in the value's native dtype (bf16 MXU path when inputs are bf16).
    out = jnp.dot(p.astype(v.dtype), v, preferred_element_type=jnp.float32)
    out_ref[0] = out.astype(out_ref.dtype)


# --------------------------------- wrapper ---------------------------------- #

def scaled_dot_product_attention(q, k, v, mask=None, *, temperature,
                                 dropout_rate=0.0, dropout_seed=0):
    """Pallas TPU ScaledDotProductAttention.forward. Returns (output, attn)."""
    B, Lq, D = q.shape
    Bk, Lk, Dk = k.shape
    Bv, Lv, Dv = v.shape
    assert (B, D) == (Bk, Dk) and (B, Lk) == (Bv, Lv), "shape mismatch"

    n = float(Lk)                                  # v.shape[1]
    scale = float((1.0 / float(temperature)) * (math.log(n + 1.0) / math.log(32.0)))
    has_mask = mask is not None

    # Query tiling: 256-row tiles (good MXU occupancy on v6e/v7x, fine on v5e),
    # full length when the sequence is short.
    TQ = Lq if Lq <= 256 else 256
    NQ = pl.cdiv(Lq, TQ)
    grid = (B, NQ)

    inputs = [q, k, v]
    in_specs = [
        pl.BlockSpec((1, TQ, D), lambda b, qi: (b, qi, 0)),
        pl.BlockSpec((1, Lk, D), lambda b, qi: (b, 0, 0)),    # qi-invariant: no re-DMA
        pl.BlockSpec((1, Lk, Dv), lambda b, qi: (b, 0, 0)),   # qi-invariant: no re-DMA
    ]

    mask_rows_one = False
    if has_mask:
        m = (jnp.asarray(mask) != 0)
        if m.ndim == 3 and m.shape[1] == 1:
            # Compact key-padding mask: never materialize (B, Lq, Lk).
            mask_rows_one = True
            m_arr = jnp.broadcast_to(m, (B, 1, Lk)).astype(jnp.int8)
            in_specs.append(pl.BlockSpec((1, 1, Lk), lambda b, qi: (b, 0, 0)))
        else:
            m_arr = jnp.broadcast_to(m, (B, Lq, Lk)).astype(jnp.int8)  # int8, not f32
            in_specs.append(pl.BlockSpec((1, TQ, Lk), lambda b, qi: (b, qi, 0)))
        inputs.append(m_arr)
    if dropout_rate > 0.0:
        inputs.append(jnp.asarray([int(dropout_seed)], jnp.int32))
        in_specs.append(pl.BlockSpec(memory_space=pltpu.MemorySpace.SMEM))

    kernel = functools.partial(_sdpa_kernel, scale=scale, has_mask=has_mask,
                               mask_rows_one=mask_rows_one,
                               dropout_rate=float(dropout_rate))

    out_dtype = q.dtype
    attn_dtype = q.dtype   # follows inputs: bf16 in -> bf16 attn writeback

    # Advisory cost estimate for the XLA scheduler.
    flops = 2 * B * Lq * Lk * (D + Dv)
    transcendentals = B * Lq * Lk
    bytes_accessed = sum(int(x.size) * jnp.dtype(x.dtype).itemsize for x in inputs)
    bytes_accessed += B * Lq * Dv * jnp.dtype(out_dtype).itemsize
    bytes_accessed += B * Lq * Lk * jnp.dtype(attn_dtype).itemsize
    cost = pl.CostEstimate(flops=flops, transcendentals=transcendentals,
                           bytes_accessed=bytes_accessed)

    # Explicit VMEM budget: per-step blocks (double-buffered) + f32 working set.
    itm = jnp.dtype(q.dtype).itemsize
    blk_bytes = (TQ * D + Lk * D + Lk * Dv) * itm
    if has_mask:
        blk_bytes += (Lk if mask_rows_one else TQ * Lk)       # int8
    blk_bytes += TQ * Dv * jnp.dtype(out_dtype).itemsize
    blk_bytes += TQ * Lk * jnp.dtype(attn_dtype).itemsize
    blk_bytes += TQ * Lk * 4                                   # f32 scores/probs
    vmem_limit = int(min(100 * 2**20, max(32 * 2**20, 3 * blk_bytes)))

    out, attn = pl.pallas_call(
        kernel,
        grid=grid,
        in_specs=in_specs,
        out_specs=(
            pl.BlockSpec((1, TQ, Dv), lambda b, qi: (b, qi, 0)),
            pl.BlockSpec((1, TQ, Lk), lambda b, qi: (b, qi, 0)),
        ),
        out_shape=(
            jax.ShapeDtypeStruct((B, Lq, Dv), out_dtype),
            jax.ShapeDtypeStruct((B, Lq, Lk), attn_dtype),
        ),
        compiler_params=pltpu.CompilerParams(
            dimension_semantics=("parallel", "parallel"),
            vmem_limit_bytes=vmem_limit),
        cost_estimate=cost,
    )(*inputs)
    return out, attn


# ----------------------------------- main ----------------------------------- #

if __name__ == "__main__":
    key = jax.random.PRNGKey(0)
    kq, kk, kv = jax.random.split(key, 3)

    B, Lq, Lk, D, Dv = 2, 8, 16, 32, 32
    temperature = math.sqrt(D)                     # typical d_k ** 0.5

    q = jax.random.normal(kq, (B, Lq, D), jnp.float32)
    k = jax.random.normal(kk, (B, Lk, D), jnp.float32)
    v = jax.random.normal(kv, (B, Lk, Dv), jnp.float32)
    # compact key-padding mask (B, 1, Lk): True => masked out (filled with -1e10)
    mask = jnp.broadcast_to(jnp.arange(Lk)[None, None, :] >= 12, (B, 1, Lk))

    # Eval-mode forward (dropout = identity), matching the PyTorch module semantics.
    out, attn = scaled_dot_product_attention(
        q, k, v, mask, temperature=temperature, dropout_rate=0.0)
    out, attn = jax.block_until_ready((out, attn))

    # pure-JAX reference
    scale = (1.0 / temperature) * (math.log(Lk + 1.0) / math.log(32.0))
    s_ref = jnp.einsum("bqd,bkd->bqk", q, k) * scale
    s_ref = jnp.where(jnp.broadcast_to(mask, (B, Lq, Lk)), MASK_FILL, s_ref)
    attn_ref = jax.nn.softmax(s_ref, axis=-1)
    out_ref = jnp.einsum("bqk,bkd->bqd", attn_ref, v)

    assert out.shape == (B, Lq, Dv) and attn.shape == (B, Lq, Lk)
    assert bool(jnp.all(jnp.isfinite(out))) and bool(jnp.all(jnp.isfinite(attn)))
    assert bool(jnp.allclose(attn, attn_ref, atol=3e-3, rtol=3e-3)), \
        float(jnp.max(jnp.abs(attn - attn_ref)))
    assert bool(jnp.allclose(out, out_ref, atol=2e-2, rtol=2e-2)), \
        float(jnp.max(jnp.abs(out - out_ref)))
    print("KERNEL_OK")
</pallas_src>

<mosaic_0001>
module attributes {stable_mosaic.version = 11 : i64} {
  func.func @_sdpa_kernel(%arg0: i32, %arg1: i32, %arg2: memref<1x8x32xf32, #tpu.memory_space<vmem>>, %arg3: memref<1x16x32xf32, #tpu.memory_space<vmem>>, %arg4: memref<1x16x32xf32, #tpu.memory_space<vmem>>, %arg5: memref<1x1x16xi8, #tpu.memory_space<vmem>>, %arg6: memref<1x8x32xf32, #tpu.memory_space<vmem>>, %arg7: memref<1x8x16xf32, #tpu.memory_space<vmem>>) attributes {dimension_semantics = [#tpu.dimension_semantics<parallel>, #tpu.dimension_semantics<parallel>], iteration_bounds = array<i64: 2, 1>, scalar_prefetch = 0 : i64, scratch_operands = 0 : i64, tpu.core_type = #tpu.core_type<tc>, window_params = [{transform_indices = @transform_0, window_bounds = array<i64: 1, 8, 32>}, {transform_indices = @transform_1, window_bounds = array<i64: 1, 16, 32>}, {transform_indices = @transform_2, window_bounds = array<i64: 1, 16, 32>}, {transform_indices = @transform_3, window_bounds = array<i64: 1, 1, 16>}, {transform_indices = @transform_4, window_bounds = array<i64: 1, 8, 32>}, {transform_indices = @transform_5, window_bounds = array<i64: 1, 8, 16>}]} {
    %c0 = arith.constant 0 : index
    %c0_0 = arith.constant 0 : index
    %c0_1 = arith.constant 0 : index
    %0 = vector.load %arg2[%c0, %c0_0, %c0_1] : memref<1x8x32xf32, #tpu.memory_space<vmem>>, vector<1x8x32xf32>
    %1 = vector.shape_cast %0 : vector<1x8x32xf32> to vector<8x32xf32>
    %c0_2 = arith.constant 0 : index
    %c0_3 = arith.constant 0 : index
    %c0_4 = arith.constant 0 : index
    %2 = vector.load %arg3[%c0_2, %c0_3, %c0_4] : memref<1x16x32xf32, #tpu.memory_space<vmem>>, vector<1x16x32xf32>
    %3 = vector.shape_cast %2 : vector<1x16x32xf32> to vector<16x32xf32>
    %c0_5 = arith.constant 0 : index
    %c0_6 = arith.constant 0 : index
    %c0_7 = arith.constant 0 : index
    %4 = vector.load %arg4[%c0_5, %c0_6, %c0_7] : memref<1x16x32xf32, #tpu.memory_space<vmem>>, vector<1x16x32xf32>
    %5 = vector.shape_cast %4 : vector<1x16x32xf32> to vector<16x32xf32>
    %cst = arith.constant 0.144513637 : f32
    %6 = vector.broadcast %cst : f32 to vector<8x32xf32>
    %7 = arith.mulf %1, %6 : vector<8x32xf32>
    %cst_8 = arith.constant dense<0.000000e+00> : vector<8x16xf32>
    %8 = tpu.matmul %7, %3, %cst_8 {dimension_numbers = #tpu.dot_dimension_numbers<[1], [1], [0], [0], [0, 0, 1, 0], [], []>} : vector<8x32xf32>, vector<16x32xf32>, vector<8x16xf32> -> vector<8x16xf32>
    %c0_9 = arith.constant 0 : index
    %c0_10 = arith.constant 0 : index
    %c0_11 = arith.constant 0 : index
    %9 = vector.load %arg5[%c0_9, %c0_10, %c0_11] : memref<1x1x16xi8, #tpu.memory_space<vmem>>, vector<1x1x16xi8>
    %10 = vector.shape_cast %9 : vector<1x1x16xi8> to vector<1x16xi8>
    %11 = arith.sitofp %10 : vector<1x16xi8> to vector<1x16xf32>
    %12 = vector.shape_cast %11 : vector<1x16xf32> to vector<1x16xf32>
    %13 = vector.broadcast %12 : vector<1x16xf32> to vector<8x16xf32>
    %cst_12 = arith.constant 0.000000e+00 : f32
    %14 = vector.broadcast %cst_12 : f32 to vector<8x16xf32>
    %15 = arith.cmpf one, %13, %14 : vector<8x16xf32>
    %cst_13 = arith.constant -1.000000e+10 : f32
    %16 = vector.broadcast %cst_13 : f32 to vector<8x16xf32>
    %17 = arith.select %15, %16, %8 : vector<8x16xi1>, vector<8x16xf32>
    %cst_14 = arith.constant dense<0xFF800000> : vector<8xf32>
    %18 = vector.multi_reduction <maximumf>, %17, %cst_14 [1] : vector<8x16xf32> to vector<8xf32>
    %19 = vector.shape_cast %18 : vector<8xf32> to vector<8x1xf32>
    %20 = vector.broadcast %19 : vector<8x1xf32> to vector<8x16xf32>
    %21 = arith.subf %17, %20 : vector<8x16xf32>
    %22 = math.exp %21 : vector<8x16xf32>
    %cst_15 = arith.constant dense<0.000000e+00> : vector<8xf32>
    %23 = vector.multi_reduction <add>, %22, %cst_15 [1] : vector<8x16xf32> to vector<8xf32>
    %24 = vector.shape_cast %23 : vector<8xf32> to vector<8x1xf32>
    %25 = tpu.reciprocal %24 {approx = true} : vector<8x1xf32> -> vector<8x1xf32>
    %26 = vector.broadcast %25 : vector<8x1xf32> to vector<8x16xf32>
    %27 = arith.mulf %22, %26 : vector<8x16xf32>
    %c0_16 = arith.constant 0 : index
    %c0_17 = arith.constant 0 : index
    %c0_18 = arith.constant 0 : index
    %28 = vector.load %arg7[%c0_16, %c0_17, %c0_18] : memref<1x8x16xf32, #tpu.memory_space<vmem>>, vector<1x8x16xf32>
    %29 = vector.shape_cast %28 : vector<1x8x16xf32> to vector<8x16xf32>
    %30 = vector.shape_cast %27 : vector<8x16xf32> to vector<1x8x16xf32>
    tpu.vector_store %arg7[%c0_16, %c0_17, %c0_18], %30 {strides = array<i32>} : memref<1x8x16xf32, #tpu.memory_space<vmem>>, vector<1x8x16xf32>,
    %cst_19 = arith.constant dense<0.000000e+00> : vector<8x32xf32>
    %31 = tpu.matmul %27, %5, %cst_19 {dimension_numbers = #tpu.dot_dimension_numbers<[1], [0], [0], [1], [0, 0, 1, 1], [], []>} : vector<8x16xf32>, vector<16x32xf32>, vector<8x32xf32> -> vector<8x32xf32>
    %c0_20 = arith.constant 0 : index
    %c0_21 = arith.constant 0 : index
    %c0_22 = arith.constant 0 : index
    %32 = vector.load %arg6[%c0_20, %c0_21, %c0_22] : memref<1x8x32xf32, #tpu.memory_space<vmem>>, vector<1x8x32xf32>
    %33 = vector.shape_cast %32 : vector<1x8x32xf32> to vector<8x32xf32>
    %34 = vector.shape_cast %31 : vector<8x32xf32> to vector<1x8x32xf32>
    tpu.vector_store %arg6[%c0_20, %c0_21, %c0_22], %34 {strides = array<i32>} : memref<1x8x32xf32, #tpu.memory_space<vmem>>, vector<1x8x32xf32>,
    return
  }
  func.func @transform_0(%arg0: i32, %arg1: i32) -> (i32, i32, i32) {
    %c0_i32 = arith.constant 0 : i32
    %c0_i32_0 = arith.constant 0 : i32
    return %arg0, %arg1, %c0_i32 : i32, i32, i32
  }
  func.func @transform_1(%arg0: i32, %arg1: i32) -> (i32, i32, i32) {
    %c0_i32 = arith.constant 0 : i32
    %c0_i32_0 = arith.constant 0 : i32
    %c0_i32_1 = arith.constant 0 : i32
    return %arg0, %c0_i32, %c0_i32_0 : i32, i32, i32
  }
  func.func @transform_2(%arg0: i32, %arg1: i32) -> (i32, i32, i32) {
    %c0_i32 = arith.constant 0 : i32
    %c0_i32_0 = arith.constant 0 : i32
    %c0_i32_1 = arith.constant 0 : i32
    return %arg0, %c0_i32, %c0_i32_0 : i32, i32, i32
  }
  func.func @transform_3(%arg0: i32, %arg1: i32) -> (i32, i32, i32) {
    %c0_i32 = arith.constant 0 : i32
    %c0_i32_0 = arith.constant 0 : i32
    %c0_i32_1 = arith.constant 0 : i32
    return %arg0, %c0_i32, %c0_i32_0 : i32, i32, i32
  }
  func.func @transform_4(%arg0: i32, %arg1: i32) -> (i32, i32, i32) {
    %c0_i32 = arith.constant 0 : i32
    %c0_i32_0 = arith.constant 0 : i32
    return %arg0, %arg1, %c0_i32 : i32, i32, i32
  }
  func.func @transform_5(%arg0: i32, %arg1: i32) -> (i32, i32, i32) {
    %c0_i32 = arith.constant 0 : i32
    %c0_i32_0 = arith.constant 0 : i32
    return %arg0, %arg1, %c0_i32 : i32, i32, i32
  }
}

</mosaic_0001>

<llo_original>
// kernel: tpu_custom_call.1
$region0: #{tpu_custom_call.1}
  #allocation0 [shape = 'u32[]', space=smem, size = 0x4, offset = 0x4, fixed_abs, tag = 'smem constant byte address 0x4 - core index']
  #allocation1 [shape = 'u32[72,128]{1,0:T(1,128)}', space=vmem, size = 0x9000, scoped, tag = 'internal scratch']
  %s0 = inlined_call_operand.hbm [shape: f32[2,8,32], index: 0, kind: input, shape index: {}]
  %s1 = inlined_call_operand.hbm [shape: f32[2,16,32], index: 1, kind: input, shape index: {}]
  %s2 = inlined_call_operand.hbm [shape: f32[2,16,32], index: 2, kind: input, shape index: {}]
  %s3 = inlined_call_operand.vmem [shape: s8[2,1,16], index: 3, kind: input, shape index: {}]
  %s4 = inlined_call_operand.hbm [shape: f32[2,8,32], index: 4, kind: output, shape index: {0}]
  %s5 = inlined_call_operand.hbm [shape: f32[2,8,16], index: 5, kind: output, shape index: {1}]
  %6 = xla_tuple %s4, %s5
  %s7 = sld [smem:[#allocation0]]
  $region69: #{tpu_custom_call.1} parent=0
    _
  %s9 = ssub.s32 1, %s7
  %s10 = scalar_select 0, %s9, %s7
  $region1: #{tpu_custom_call.1} parent=0
    #allocation2 [shape = 'u8[8192]{0}', space=vmem, size = 0x2000, scoped, tag = 'input window, operand 0']
    #allocation3 [shape = 's32[2]{0}', space=sflag, size = 0x8, scoped, tag = 'scoped memory for tpu_custom_call.1']
    #allocation4 [shape = 's32[2]{0}', space=sflag, size = 0x8, scoped, tag = 'scoped memory for tpu_custom_call.1']
    #allocation5 [shape = 'u8[16384]{0}', space=vmem, size = 0x4000, scoped, tag = 'input window, operand 1']
    #allocation6 [shape = 's32[2]{0}', space=sflag, size = 0x8, scoped, tag = 'scoped memory for tpu_custom_call.1']
    #allocation7 [shape = 'u8[16384]{0}', space=vmem, size = 0x4000, scoped, tag = 'input window, operand 2']
    #allocation8 [shape = 'u8[8192]{0}', space=vmem, size = 0x2000, scoped, tag = 'output window, operand 0']
    #allocation9 [shape = 'u8[8192]{0}', space=vmem, size = 0x2000, scoped, tag = 'output window, operand 1']
    #allocation10 [shape = 's32[2]{0}', space=sflag, size = 0x8, scoped, tag = 'scoped memory for tpu_custom_call.1']
    %11 = vsyncpa [#allocation3], 0
    %s12 = scalar_lea.sflag [#allocation3], 1
    %13 = vsyncpa %s12, 0
    %14 = vsyncpa [#allocation6], 0
    %s15 = scalar_lea.sflag [#allocation6], 1
    %16 = vsyncpa %s15, 0
    %17 = vsyncpa [#allocation4], 0
    %s18 = scalar_lea.sflag [#allocation4], 1
    %19 = vsyncpa %s18, 0
    %20 = vsyncpa [#allocation10], 0
    %s21 = scalar_lea.sflag [#allocation10], 1
    %22 = vsyncpa %s21, 0
    loop: start=0, step=1, limit=4
    $region2: #{tpu_custom_call.1} parent=1 // loop_pre_header
      _
    $region3: #{tpu_custom_call.1} parent=1 // loop_header
      %s24 = sphi 0, %s28
      %p25 = scmp.ge.s32.totalorder %s24, 4
      %s31 = sphi 0, %s43
      %s32 = sphi 0, %s39
      %s33 = sphi 0, %s31
      %s34 = sphi 0, %s32
      %s35 = sphi 0, %s33
      %s36 = sphi 0, %s34
      %s48 = sphi 0, %s50
      %s51 = sphi 0, %s48
      %s52 = sphi 0, %s51
      %s68 = sphi 0, %s52
      %s74 = sphi 0, %s76
      %s77 = sphi 0, %s74
      %s78 = sphi 0, %s77
      %s94 = sphi 0, %s78
      %s100 = sphi 0, %s102
      %s103 = sphi 0, %s100
      %s104 = sphi 0, %s103
      %s120 = sphi 0, %s104
      %s126 = sphi 0, %s128
      %s129 = sphi 0, %s126
      %s130 = sphi 0, %s129
      %s146 = sphi 0, %s130
      %s154 = sphi 0, %s156
      %s157 = sphi 0, %s154
      %s158 = sphi 0, %s157
      %s174 = sphi 0, %s158
      %s182 = sphi 0, %s184
      %s185 = sphi 0, %s182
      %s186 = sphi 0, %s185
      %s202 = sphi 0, %s186
    $region4: #{tpu_custom_call.1} parent=1 // loop_header_branch
      %27 = sbr.rel (%p25) target = $region8
    $region5: #{tpu_custom_call.1} parent=1 // loop_body
      %s29 = ssub.s32 %s24, 1
      %s30 = ssub.s32 %s24, 2
      %s37 = sadd.s32 1, %s32
      %p38 = scmp.ge.s32.totalorder %s37, 1
      %s39 = scalar_select %p38, 0, %s37
      %s40 = sadd.s32 1, %s31
      %s41 = scalar_select %p38, %s40, %s31
      %p42 = scmp.ge.s32.totalorder %s41, 2
      %s43 = scalar_select %p42, 0, %s41
      %s44 = ssub.s32 %s31, %s43
      %s45 = ssub.s32 %s32, %s39
      %s46 = sor.u32 %s44, %s45
      %p47 = scmp.eq.s32.totalorder %s46, 0
      %s49 = sadd.s32 %s48, 1
      %s50 = scalar_select %p47, %s48, %s49
      %p53 = pneg %p47
      %p54 = scmp.eq.s32.totalorder %s24, 1
      %p55 = por %p53, %p54
      %p56 = scmp.ne.s32.totalorder %s48, %s51
      %p57 = scmp.eq.s32.totalorder %s24, 0
      %p58 = por %p56, %p57
      %p59 = scmp.ne.s32.totalorder %s48, %s51
      %p60 = scmp.eq.s32.totalorder %s29, 1
      %p61 = por %p59, %p60
      %p62 = scmp.ne.s32.totalorder %s51, %s52
      %p63 = scmp.eq.s32.totalorder %s29, 0
      %p64 = por %p62, %p63
      %p65 = scmp.ne.s32.totalorder %s51, %s52
      %p66 = scmp.eq.s32.totalorder %s30, 1
      %p67 = por %p65, %p66
      %p69 = scmp.ne.s32.totalorder %s52, %s68
      %p70 = scmp.eq.s32.totalorder %s30, 0
      %p71 = por %p69, %p70
      %s72 = ssub.s32 %s31, %s43
      %p73 = scmp.eq.s32.totalorder %s72, 0
      %s75 = sadd.s32 %s74, 1
      %s76 = scalar_select %p73, %s74, %s75
      %p79 = pneg %p73
      %p80 = scmp.eq.s32.totalorder %s24, 1
      %p81 = por %p79, %p80
      %p82 = scmp.ne.s32.totalorder %s74, %s77
      %p83 = scmp.eq.s32.totalorder %s24, 0
      %p84 = por %p82, %p83
      %p85 = scmp.ne.s32.totalorder %s74, %s77
      %p86 = scmp.eq.s32.totalorder %s29, 1
      %p87 = por %p85, %p86
      %p88 = scmp.ne.s32.totalorder %s77, %s78
      %p89 = scmp.eq.s32.totalorder %s29, 0
      %p90 = por %p88, %p89
      %p91 = scmp.ne.s32.totalorder %s77, %s78
      %p92 = scmp.eq.s32.totalorder %s30, 1
      %p93 = por %p91, %p92
      %p95 = scmp.ne.s32.totalorder %s78, %s94
      %p96 = scmp.eq.s32.totalorder %s30, 0
      %p97 = por %p95, %p96
      %s98 = ssub.s32 %s31, %s43
      %p99 = scmp.eq.s32.totalorder %s98, 0
      %s101 = sadd.s32 %s100, 1
      %s102 = scalar_select %p99, %s100, %s101
      %p105 = pneg %p99
      %p106 = scmp.eq.s32.totalorder %s24, 1
      %p107 = por %p105, %p106
      %p108 = scmp.ne.s32.totalorder %s100, %s103
      %p109 = scmp.eq.s32.totalorder %s24, 0
      %p110 = por %p108, %p109
      %p111 = scmp.ne.s32.totalorder %s100, %s103
      %p112 = scmp.eq.s32.totalorder %s29, 1
      %p113 = por %p111, %p112
      %p114 = scmp.ne.s32.totalorder %s103, %s104
      %p115 = scmp.eq.s32.totalorder %s29, 0
      %p116 = por %p114, %p115
      %p117 = scmp.ne.s32.totalorder %s103, %s104
      %p118 = scmp.eq.s32.totalorder %s30, 1
      %p119 = por %p117, %p118
      %p121 = scmp.ne.s32.totalorder %s104, %s120
      %p122 = scmp.eq.s32.totalorder %s30, 0
      %p123 = por %p121, %p122
      %s124 = ssub.s32 %s31, %s43
      %p125 = scmp.eq.s32.totalorder %s124, 0
      %s127 = sadd.s32 %s126, 1
      %s128 = scalar_select %p125, %s126, %s127
      %p131 = pneg %p125
      %p132 = scmp.eq.s32.totalorder %s24, 1
      %p133 = por %p131, %p132
      %p134 = scmp.ne.s32.totalorder %s126, %s129
      %p135 = scmp.eq.s32.totalorder %s24, 0
      %p136 = por %p134, %p135
      %p137 = scmp.ne.s32.totalorder %s126, %s129
      %p138 = scmp.eq.s32.totalorder %s29, 1
      %p139 = por %p137, %p138
      %p140 = scmp.ne.s32.totalorder %s129, %s130
      %p141 = scmp.eq.s32.totalorder %s29, 0
      %p142 = por %p140, %p141
      %p143 = scmp.ne.s32.totalorder %s129, %s130
      %p144 = scmp.eq.s32.totalorder %s30, 1
      %p145 = por %p143, %p144
      %p147 = scmp.ne.s32.totalorder %s130, %s146
      %p148 = scmp.eq.s32.totalorder %s30, 0
      %p149 = por %p147, %p148
      %s150 = ssub.s32 %s31, %s43
      %s151 = ssub.s32 %s32, %s39
      %s152 = sor.u32 %s150, %s151
      %p153 = scmp.eq.s32.totalorder %s152, 0
      %s155 = sadd.s32 %s154, 1
      %s156 = scalar_select %p153, %s154, %s155
      %p159 = pneg %p153
      %p160 = scmp.eq.s32.totalorder %s24, 1
      %p161 = por %p159, %p160
      %p162 = scmp.ne.s32.totalorder %s154, %s157
      %p163 = scmp.eq.s32.totalorder %s24, 0
      %p164 = por %p162, %p163
      %p165 = scmp.ne.s32.totalorder %s154, %s157
      %p166 = scmp.eq.s32.totalorder %s29, 1
      %p167 = por %p165, %p166
      %p168 = scmp.ne.s32.totalorder %s157, %s158
      %p169 = scmp.eq.s32.totalorder %s29, 0
      %p170 = por %p168, %p169
      %p171 = scmp.ne.s32.totalorder %s157, %s158
      %p172 = scmp.eq.s32.totalorder %s30, 1
      %p173 = por %p171, %p172
      %p175 = scmp.ne.s32.totalorder %s158, %s174
      %p176 = scmp.eq.s32.totalorder %s30, 0
      %p177 = por %p175, %p176
      %s178 = ssub.s32 %s31, %s43
      %s179 = ssub.s32 %s32, %s39
      %s180 = sor.u32 %s178, %s179
      %p181 = scmp.eq.s32.totalorder %s180, 0
      %s183 = sadd.s32 %s182, 1
      %s184 = scalar_select %p181, %s182, %s183
      %p187 = pneg %p181
      %p188 = scmp.eq.s32.totalorder %s24, 1
      %p189 = por %p187, %p188
      %p190 = scmp.ne.s32.totalorder %s182, %s185
      %p191 = scmp.eq.s32.totalorder %s24, 0
      %p192 = por %p190, %p191
      %p193 = scmp.ne.s32.totalorder %s182, %s185
      %p194 = scmp.eq.s32.totalorder %s29, 1
      %p195 = por %p193, %p194
      %p196 = scmp.ne.s32.totalorder %s185, %s186
      %p197 = scmp.eq.s32.totalorder %s29, 0
      %p198 = por %p196, %p197
      %p199 = scmp.ne.s32.totalorder %s185, %s186
      %p200 = scmp.eq.s32.totalorder %s30, 1
      %p201 = por %p199, %p200
      %p203 = scmp.ne.s32.totalorder %s186, %s202
      %p204 = scmp.eq.s32.totalorder %s30, 0
      %p205 = por %p203, %p204
      %p206 = scmp.le.s32.totalorder 1, %s24
      %p207 = scmp.lt.s32.totalorder %s24, 3
      %p208 = pnand %p206, %p207
      %p209 = pneg %p208
      // Predicated region
      $region9: #{tpu_custom_call.1} parent=5 // pred_check
        _
      $region10: #{tpu_custom_call.1} parent=5 // pred_check_branch
        %211 = sbr.rel (%p208) target = $region12
      $region11: #{tpu_custom_call.1} parent=5 // pred_region
        %s212 = ssub.s32 %s24, 1
      $region12: #{tpu_custom_call.1} parent=5 // pred_fallthru
        _
      %p213 = scmp.lt.s32.totalorder %s24, 2
      // Predicated region
      $region13: #{tpu_custom_call.1} parent=5 // pred_check
        %p214 = pneg %p213
      $region14: #{tpu_custom_call.1} parent=5 // pred_check_branch
        %216 = sbr.rel (%p214) target = $region16
      $region15: #{tpu_custom_call.1} parent=5 // pred_region
        // Predicated region
        $region17: #{tpu_custom_call.1} parent=15 // pred_check
          %p217 = pneg %p58
        $region18: #{tpu_custom_call.1} parent=15 // pred_check_branch
          %219 = sbr.rel (%p217) target = $region20
        $region19: #{tpu_custom_call.1} parent=15 // pred_region
          %s220 = sand.u32 %s48, 1
          %s221 = scalar_lea.sflag [#allocation3], %s220
          %s222 = sand.u32 %s48, 1
          %s223 = smul.addr %s222, 8
          %s224 = scalar_lea.vmem [#allocation2], %s223
          %226 = vsyncadd %s221, 0
          %s227 = sadd.s32 %s32, %s31
          %s228 = smul.addr %s227, 8
          %s229 = scalar_lea.hbm %s0, %s228
          %s231 = sshll.u32 %s229, 4
          %s232 = int_to_ptr.hbm [resolvable:$true] %s231
          %s233 = sshll.u32 %s224, 4
          %s234 = int_to_ptr.vmem [resolvable:$true] %s233
          %236 = dma.hbm_to_vmem [thread:$0]  %s232, 128, %s234, %s221
        $region20: #{tpu_custom_call.1} parent=15 // pred_fallthru
          _
        // Predicated region
        $region21: #{tpu_custom_call.1} parent=15 // pred_check
          %p237 = pneg %p84
        $region22: #{tpu_custom_call.1} parent=15 // pred_check_branch
          %239 = sbr.rel (%p237) target = $region24
        $region23: #{tpu_custom_call.1} parent=15 // pred_region
          %s240 = sand.u32 %s24, 1
          %s241 = scalar_lea.sflag [#allocation6], %s240
          %s242 = sand.u32 %s74, 1
          %s243 = smul.addr %s242, 16
          %s244 = scalar_lea.vmem [#allocation5], %s243
          %246 = vsyncadd %s241, 0
          %s247 = smul.addr %s31, 2
          %s248 = smul.addr %s247, 8
          %s249 = scalar_lea.hbm %s1, %s248
          %s250 = sshll.u32 %s249, 4
          %s251 = int_to_ptr.hbm [resolvable:$true] %s250
          %s252 = sshll.u32 %s244, 4
          %s253 = int_to_ptr.vmem [resolvable:$true] %s252
          %258 = dma.hbm_to_vmem [thread:$0]  %s251, 256, %s253, %s241, 128, 128, 8
        $region24: #{tpu_custom_call.1} parent=15 // pred_fallthru
          _
        // Predicated region
        $region25: #{tpu_custom_call.1} parent=15 // pred_check
          %p259 = pneg %p110
        $region26: #{tpu_custom_call.1} parent=15 // pred_check_branch
          %261 = sbr.rel (%p259) target = $region28
        $region27: #{tpu_custom_call.1} parent=15 // pred_region
          %s262 = sand.u32 %s24, 1
          %s263 = scalar_lea.sflag [#allocation6], %s262
          %s264 = sand.u32 %s100, 1
          %s265 = smul.addr %s264, 16
          %s266 = scalar_lea.vmem [#allocation7], %s265
          %268 = vsyncadd %s263, 0
          %s269 = smul.addr %s31, 2
          %s270 = smul.addr %s269, 8
          %s271 = scalar_lea.hbm %s2, %s270
          %s272 = sshll.u32 %s271, 4
          %s273 = int_to_ptr.hbm [resolvable:$true] %s272
          %s274 = sshll.u32 %s266, 4
          %s275 = int_to_ptr.vmem [resolvable:$true] %s274
          %280 = dma.hbm_to_vmem [thread:$0]  %s273, 256, %s275, %s263, 128, 128, 8
        $region28: #{tpu_custom_call.1} parent=15 // pred_fallthru
          _
        // Predicated region
        $region29: #{tpu_custom_call.1} parent=15 // pred_check
          %p281 = pneg %p136
        $region30: #{tpu_custom_call.1} parent=15 // pred_check_branch
          %283 = sbr.rel (%p281) target = $region32
        $region31: #{tpu_custom_call.1} parent=15 // pred_region
          %p284 = scmp.lt.s32.totalorder %s31, 1
          %s285 = scalar_select %p284, %s31, 1
          %s286 = scalar_lea.vmem %s3, %s285
        $region32: #{tpu_custom_call.1} parent=15 // pred_fallthru
          _
      $region16: #{tpu_custom_call.1} parent=5 // pred_fallthru
        _
      %p287 = scmp.le.s32.totalorder 1, %s24
      %p288 = scmp.lt.s32.totalorder %s24, 3
      %p289 = pnand %p287, %p288
      %p290 = pneg %p289
      // Predicated region
      $region33: #{tpu_custom_call.1} parent=5 // pred_check
        _
      $region34: #{tpu_custom_call.1} parent=5 // pred_check_branch
        %292 = sbr.rel (%p289) target = $region36
      $region35: #{tpu_custom_call.1} parent=5 // pred_region
        %s293 = ssub.s32 %s24, 1
        %s294 = sand.u32 %s51, 1
        %s295 = scalar_lea.sflag [#allocation3], %s294
        %s296 = sand.u32 %s51, 1
        %s297 = smul.addr %s296, 8
        %s298 = scalar_lea.vmem [#allocation2], %s297
        // Predicated region
        $region37: #{tpu_custom_call.1} parent=35 // pred_check
          %p299 = pneg %p64
        $region38: #{tpu_custom_call.1} parent=35 // pred_check_branch
          %301 = sbr.rel (%p299) target = $region40
        $region39: #{tpu_custom_call.1} parent=35 // pred_region
          %303 = dma.done %s295, 128
        $region40: #{tpu_custom_call.1} parent=35 // pred_fallthru
          _
        %s304 = sand.u32 %s29, 1
        %s305 = scalar_lea.sflag [#allocation6], %s304
        %s306 = sand.u32 %s77, 1
        %s307 = smul.addr %s306, 16
        %s308 = scalar_lea.vmem [#allocation5], %s307
        // Predicated region
        $region41: #{tpu_custom_call.1} parent=35 // pred_check
          %p309 = pneg %p90
        $region42: #{tpu_custom_call.1} parent=35 // pred_check_branch
          %311 = sbr.rel (%p309) target = $region44
        $region43: #{tpu_custom_call.1} parent=35 // pred_region
          %313 = dma.done %s305, 256
        $region44: #{tpu_custom_call.1} parent=35 // pred_fallthru
          _
        %s314 = sand.u32 %s29, 1
        %s315 = scalar_lea.sflag [#allocation6], %s314
        %s316 = sand.u32 %s103, 1
        %s317 = smul.addr %s316, 16
        %s318 = scalar_lea.vmem [#allocation7], %s317
        // Predicated region
        $region45: #{tpu_custom_call.1} parent=35 // pred_check
          %p319 = pneg %p116
        $region46: #{tpu_custom_call.1} parent=35 // pred_check_branch
          %321 = sbr.rel (%p319) target = $region48
        $region47: #{tpu_custom_call.1} parent=35 // pred_region
          %323 = dma.done %s315, 256
        $region48: #{tpu_custom_call.1} parent=35 // pred_fallthru
          _
        %s324 = sand.u32 %s51, 1
        %s325 = scalar_lea.sflag [#allocation3], %s324
        %s326 = sand.u32 %s51, 1
        %s327 = smul.addr %s326, 8
        %s328 = scalar_lea.vmem [#allocation2], %s327
        %p329 = pneg %p64
        %p330 = pneg %p61
        %s331 = sand.u32 %s29, 1
        %s332 = scalar_lea.sflag [#allocation6], %s331
        %s333 = sand.u32 %s77, 1
        %s334 = smul.addr %s333, 16
        %s335 = scalar_lea.vmem [#allocation5], %s334
        %p336 = pneg %p90
        %p337 = pneg %p87
        %s338 = sand.u32 %s29, 1
        %s339 = scalar_lea.sflag [#allocation6], %s338
        %s340 = sand.u32 %s103, 1
        %s341 = smul.addr %s340, 16
        %s342 = scalar_lea.vmem [#allocation7], %s341
        %p343 = pneg %p116
        %p344 = pneg %p113
        %p345 = scmp.lt.s32.totalorder %s33, 1
        %s346 = scalar_select %p345, %s33, 1
        %s347 = scalar_lea.vmem %s3, %s346
        %p348 = pneg %p142
        %p349 = pneg %p139
        %p350 = pneg %p170
        %p351 = pneg %p167
        %s352 = sand.u32 %s157, 1
        %s353 = scalar_lea.sflag [#allocation4], %s352
        %s354 = sand.u32 %s157, 1
        %s355 = smul.addr %s354, 8
        %s356 = scalar_lea.vmem [#allocation8], %s355
        %p357 = pneg %p198
        %p358 = pneg %p195
        %s359 = sand.u32 %s185, 1
        %s360 = scalar_lea.sflag [#allocation10], %s359
        %s361 = sand.u32 %s185, 1
        %s362 = smul.addr %s361, 8
        %s363 = scalar_lea.vmem [#allocation9], %s362
        %p364 = scmp.lt.s32.totalorder %s33, 1
        %s365 = scalar_select %p364, %s33, 1
        %s366 = scalar_lea.vmem %s3, %s365
        %v367 = vld [vmem:[%s298] sm:$0xff]
        %v368 = vld [vmem:[%s308] sm:$0xff]
        %v369 = vld [vmem:[%s308 + $0x8] sm:$0xff]
        %v370 = vld [vmem:[%s318] sm:$0xff]
        %v371 = vld [vmem:[%s318 + $0x8] sm:$0xff]
        %v372 = vmul.f32 %v367, 0.14451364
        %vm373 = vcmask 261120
        %v375 = vsel %vm373, %v372, 0
        %v378 = vsel %vm373, %v368, 0
        %v381 = vsel %vm373, %v369, 0
        %383 = vmatpush.xpose.msra.mxu0 0.0
        %384 = vmatpush.xpose.msra.mxu0 0.0
        %385 = vmatpush.xpose.msra.mxu0 0.0
        %386 = vmatpush.xpose.msra.mxu0 0.0
        %387 = vmatpush.xpose.msra.mxu0 0.0
        %388 = vmatpush.xpose.msra.mxu0 0.0
        %389 = vmatpush.xpose.msra.mxu0 0.0
        %390 = vmatpush.xpose.msra.mxu0 0.0
        %391 = vmatpush.xpose.msra.mxu0 0.0
        %392 = vmatpush.xpose.msra.mxu0 0.0
        %393 = vmatpush.xpose.msra.mxu0 0.0
        %394 = vmatpush.xpose.msra.mxu0 0.0
        %395 = vmatpush.xpose.msra.mxu0 0.0
        %396 = vmatpush.xpose.msra.mxu0 0.0
        %397 = vmatpush.xpose.msra.mxu0 %v381
        %398 = vmatpush.xpose.msra.mxu0 %v378
        %399 = vmatmul.f32.gmra.mxu0 %v375
        %v400 = vpop.f32.mrf.mxu0
        %v401 = vadd.f32 0.0, %v400
        %402 = vdwg.mxu0
        %v403 = vld [vmem:[%s366] sm:$0x1]
        %v404 = vunpack.c.0.s8 %v403
        %v405 = vcvt.s32.f32 %v404
        %v406 = vperm.slane %v405, 0
        %vm407 = vcmp.ne.f32.partialorder %v406, 0.0
        %v408 = vsel %vm407, -1e+10, %v401
        %vm409 = vcmask 130048
        %v410 = vsel %vm409, %v408, -inf
        %411 = vmax.xlane.f32.xlu0 %v410
        %v412 = vpop.xlane.xlu0 %411
        %v413 = vsub.f32 %v408, %v412
        %v414 = vmul.f32 %v413, 1.442695
        %v415 = vpow.pop %v414
        %v416 = vsel %vm409, %v415, 0.0
        %417 = vadd.xlane.f32.xlu0 %v416
        %v418 = vpop.xlane.xlu0 %417
        %v419 = vrcp.pop %v418
        %v420 = vmul.f32 %v415, %v419
        %421 = vst.msk [vmem:[%s363] sm:$0xff] %vm409, %v420
        %v423 = vsel %vm409, %v420, 0
        %425 = vmatpush.msra.mxu0 0.0
        %426 = vmatpush.msra.mxu0 0.0
        %427 = vmatpush.msra.mxu0 0.0
        %428 = vmatpush.msra.mxu0 0.0
        %429 = vmatpush.msra.mxu0 0.0
        %430 = vmatpush.msra.mxu0 0.0
        %431 = vmatpush.msra.mxu0 0.0
        %432 = vmatpush.msra.mxu0 0.0
        %433 = vmatpush.msra.mxu0 0.0
        %434 = vmatpush.msra.mxu0 0.0
        %435 = vmatpush.msra.mxu0 0.0
        %436 = vmatpush.msra.mxu0 0.0
        %437 = vmatpush.msra.mxu0 0.0
        %438 = vmatpush.msra.mxu0 0.0
        %439 = vmatpush.msra.mxu0 %v371
        %440 = vmatpush.msra.mxu0 %v370
        %441 = vmatmul.f32.gmra.mxu0 %v423
        %v442 = vpop.f32.mrf.mxu0
        %v443 = vadd.f32 0.0, %v442
        %444 = vdwg.mxu0
        %445 = vst.msk [vmem:[%s356] sm:$0xff] %vm373, %v443
        %s446 = sand.u32 %s157, 1
        %s447 = scalar_lea.sflag [#allocation4], %s446
        %s448 = sand.u32 %s157, 1
        %s449 = smul.addr %s448, 8
        %s450 = scalar_lea.vmem [#allocation8], %s449
        %s451 = sand.u32 %s185, 1
        %s452 = scalar_lea.sflag [#allocation10], %s451
        %s453 = sand.u32 %s185, 1
        %s454 = smul.addr %s453, 8
        %s455 = scalar_lea.vmem [#allocation9], %s454
        // Predicated region
        $region49: #{tpu_custom_call.1} parent=35 // pred_check
          %p456 = pneg %p167
        $region50: #{tpu_custom_call.1} parent=35 // pred_check_branch
          %458 = sbr.rel (%p456) target = $region52
        $region51: #{tpu_custom_call.1} parent=35 // pred_region
          %460 = vsyncadd %s447, 0
          %s461 = sadd.s32 %s34, %s33
          %s462 = smul.addr %s461, 8
          %s463 = scalar_lea.hbm %s4, %s462
          %s465 = sshll.u32 %s450, 4
          %s466 = int_to_ptr.vmem [resolvable:$true] %s465
          %s467 = sshll.u32 %s463, 4
          %s468 = int_to_ptr.hbm [resolvable:$true] %s467
          %470 = dma.vmem_to_hbm [thread:$0]  %s466, 128, %s468, %s447
        $region52: #{tpu_custom_call.1} parent=35 // pred_fallthru
          _
        // Predicated region
        $region53: #{tpu_custom_call.1} parent=35 // pred_check
          %p471 = pneg %p195
        $region54: #{tpu_custom_call.1} parent=35 // pred_check_branch
          %473 = sbr.rel (%p471) target = $region56
        $region55: #{tpu_custom_call.1} parent=35 // pred_region
          %475 = vsyncadd %s452, 0
          %s476 = sadd.s32 %s34, %s33
          %s477 = smul.addr %s476, 8
          %s478 = scalar_lea.hbm %s5, %s477
          %s480 = sshll.u32 %s455, 4
          %s481 = int_to_ptr.vmem [resolvable:$true] %s480
          %s482 = sshll.u32 %s478, 4
          %s483 = int_to_ptr.hbm [resolvable:$true] %s482
          %485 = dma.vmem_to_hbm [thread:$0]  %s481, 128, %s483, %s452
        $region56: #{tpu_custom_call.1} parent=35 // pred_fallthru
          _
      $region36: #{tpu_custom_call.1} parent=5 // pred_fallthru
        _
      %p486 = scmp.le.s32.totalorder 2, %s24
      // Predicated region
      $region57: #{tpu_custom_call.1} parent=5 // pred_check
        %p487 = pneg %p486
      $region58: #{tpu_custom_call.1} parent=5 // pred_check_branch
        %489 = sbr.rel (%p487) target = $region60
      $region59: #{tpu_custom_call.1} parent=5 // pred_region
        %s490 = ssub.s32 %s24, 2
        // Predicated region
        $region61: #{tpu_custom_call.1} parent=59 // pred_check
          %p491 = pneg %p173
        $region62: #{tpu_custom_call.1} parent=59 // pred_check_branch
          %493 = sbr.rel (%p491) target = $region64
        $region63: #{tpu_custom_call.1} parent=59 // pred_region
          %s494 = sand.u32 %s158, 1
          %s495 = scalar_lea.sflag [#allocation4], %s494
          %s496 = sand.u32 %s158, 1
          %s497 = smul.addr %s496, 8
          %s498 = scalar_lea.vmem [#allocation8], %s497
          %500 = dma.done %s495, 128
        $region64: #{tpu_custom_call.1} parent=59 // pred_fallthru
          _
        // Predicated region
        $region65: #{tpu_custom_call.1} parent=59 // pred_check
          %p501 = pneg %p201
        $region66: #{tpu_custom_call.1} parent=59 // pred_check_branch
          %503 = sbr.rel (%p501) target = $region68
        $region67: #{tpu_custom_call.1} parent=59 // pred_region
          %s504 = sand.u32 %s186, 1
          %s505 = scalar_lea.sflag [#allocation10], %s504
          %s506 = sand.u32 %s186, 1
          %s507 = smul.addr %s506, 8
          %s508 = scalar_lea.vmem [#allocation9], %s507
          %510 = dma.done %s505, 128
        $region68: #{tpu_custom_call.1} parent=59 // pred_fallthru
          _
      $region60: #{tpu_custom_call.1} parent=5 // pred_fallthru
        _
    $region6: #{tpu_custom_call.1} parent=1 // loop_footer
      %s28 = sadd.s32 1, %s24
    $region7: #{tpu_custom_call.1} parent=1 // loop_footer_branch
      %23 = sbr.rel target = $region3
    $region8: #{tpu_custom_call.1} parent=1 // loop_exit
      _
    %511 = vsyncpa [#allocation3], 1
    %s512 = scalar_lea.sflag [#allocation3], 1
    %513 = vsyncpa %s512, 1
    %514 = vsyncpa [#allocation6], 1
    %s515 = scalar_lea.sflag [#allocation6], 1
    %516 = vsyncpa %s515, 1
    %517 = vsyncpa [#allocation4], 1
    %s518 = scalar_lea.sflag [#allocation4], 1
    %519 = vsyncpa %s518, 1
    %520 = vsyncpa [#allocation10], 1
    %s521 = scalar_lea.sflag [#allocation10], 1
    %522 = vsyncpa %s521, 1

</llo_original>
